<compile_context>
chip_gen: v7x
topology: tpu7x:2x2x1
jax: 0.10.0
libtpu: 0.0.40
codegen_flags: <defaults>
</compile_context>

<pallas_src>
import functools

import jax
import jax.numpy as jnp
from jax.experimental import pallas as pl
from jax.experimental.pallas import tpu as pltpu


def _round_up(x, m):
    return ((x + m - 1) // m) * m


def _bcnet_kernel(x_ref, w1_ref, b1_ref, w2_ref, b2_ref, w3_ref, b3_ref, o_ref):
    """Fused 3-layer MLP for one (block_b, in_dim) batch tile, VMEM resident."""
    x = x_ref[...]  # (block_b, in_dim) f32

    h1 = jnp.dot(x, w1_ref[...], preferred_element_type=jnp.float32) + b1_ref[...]
    h1 = jnp.maximum(h1, 0.0)

    h2 = jnp.dot(h1, w2_ref[...], preferred_element_type=jnp.float32) + b2_ref[...]
    h2 = jnp.maximum(h2, 0.0)

    # w3 stored as (hid, out_dim): plain MXU matmul, no h2 transpose needed.
    out = jnp.dot(h2, w3_ref[...], preferred_element_type=jnp.float32) + b3_ref[...]

    o_ref[...] = out.astype(o_ref.dtype)


@functools.partial(jax.jit, static_argnames=("block_b",))
def bcnet_forward(x, params, *, block_b=None):
    """x: (B, input_dim) float32.  Returns (B, output_dim).

    params layout:
      w1: (input_dim, 64)   b1: (1, 64)
      w2: (64, 64)          b2: (1, 64)
      w3: (64, output_dim)  b3: (1, output_dim)
    """
    B, in_dim = x.shape
    hid = params["w1"].shape[1]
    out_dim = params["w3"].shape[1]

    # Batch tile: multiple of 128 rows, capped at 8192; for large batches aim
    # for >= 4 grid steps (pipelining + >=2 steps per core on v7x megacore).
    if block_b is None:
        if B <= 1024:
            block_b = _round_up(B, 128)
        else:
            block_b = min(8192, _round_up(-(-B // 4), 128))
    block_b = max(128, _round_up(block_b, 128))

    grid = (pl.cdiv(B, block_b),)  # ragged last block handled by masking

    # Weights/biases are tiny: replicate the full tensors to every grid step.
    rep = lambda shape: pl.BlockSpec(shape, lambda i: (0,) * len(shape))

    out = pl.pallas_call(
        _bcnet_kernel,
        out_shape=jax.ShapeDtypeStruct((B, out_dim), x.dtype),
        grid=grid,
        in_specs=[
            pl.BlockSpec((block_b, in_dim), lambda i: (i, 0)),  # x tile
            rep((in_dim, hid)),   # w1
            rep((1, hid)),        # b1
            rep((hid, hid)),      # w2
            rep((1, hid)),        # b2
            rep((hid, out_dim)),  # w3 (already transposed to matmul layout)
            rep((1, out_dim)),    # b3
        ],
        out_specs=pl.BlockSpec((block_b, out_dim), lambda i: (i, 0)),
        compiler_params=pltpu.CompilerParams(
            dimension_semantics=("parallel",),
            vmem_limit_bytes=48 * 1024 * 1024,
        ),
    )(x, params["w1"], params["b1"], params["w2"], params["b2"],
      params["w3"], params["b3"])

    return out


def init_bcnet_params(key, input_dim, output_dim, hidden=64, dtype=jnp.float32):
    """PyTorch nn.Linear-style init (U[-1/sqrt(fan_in), 1/sqrt(fan_in)])."""
    def linear(key, fan_in, fan_out):
        kw, kb = jax.random.split(key)
        bound = 1.0 / jnp.sqrt(fan_in)
        w = jax.random.uniform(kw, (fan_in, fan_out), dtype, -bound, bound)
        b = jax.random.uniform(kb, (fan_out,), dtype, -bound, bound)
        return w, b

    k1, k2, k3 = jax.random.split(key, 3)
    w1, b1 = linear(k1, input_dim, hidden)
    w2, b2 = linear(k2, hidden, hidden)
    w3, b3 = linear(k3, hidden, output_dim)
    return {
        "w1": w1,                          # (in, hid)
        "b1": b1.reshape(1, hidden),       # (1, hid)
        "w2": w2,                          # (hid, hid)
        "b2": b2.reshape(1, hidden),       # (1, hid)
        "w3": w3,                          # (hid, out)  matmul layout
        "b3": b3.reshape(1, output_dim),   # (1, out)
    }


def bcnet_reference(x, p):
    h1 = jnp.maximum(x @ p["w1"] + p["b1"], 0.0)
    h2 = jnp.maximum(h1 @ p["w2"] + p["b2"], 0.0)
    return h2 @ p["w3"] + p["b3"]


if __name__ == "__main__":
    key = jax.random.PRNGKey(0)
    kx, kp = jax.random.split(key)

    batch, input_dim, output_dim = 8, 32, 8
    x = jax.random.normal(kx, (batch, input_dim), jnp.float32)
    params = init_bcnet_params(kp, input_dim, output_dim)

    out = bcnet_forward(x, params)
    jax.block_until_ready(out)

    ref = bcnet_reference(x, params)
    assert out.shape == (batch, output_dim)
    assert jnp.allclose(out, ref, atol=1e-5, rtol=1e-5), "mismatch vs reference"

    # Also exercise a ragged multi-tile batch (masked last block, >=2 grid steps).
    batch2 = 3000
    x2 = jax.random.normal(kx, (batch2, input_dim), jnp.float32)
    out2 = bcnet_forward(x2, params, block_b=1024)
    jax.block_until_ready(out2)
    assert jnp.allclose(out2, bcnet_reference(x2, params), atol=1e-5, rtol=1e-5)

    print("KERNEL_OK")
</pallas_src>

<mosaic_0001>
module attributes {stable_mosaic.version = 11 : i64} {
  func.func @_bcnet_kernel(%arg0: i32, %arg1: memref<128x32xf32, #tpu.memory_space<vmem>>, %arg2: memref<32x64xf32, #tpu.memory_space<vmem>>, %arg3: memref<1x64xf32, #tpu.memory_space<vmem>>, %arg4: memref<64x64xf32, #tpu.memory_space<vmem>>, %arg5: memref<1x64xf32, #tpu.memory_space<vmem>>, %arg6: memref<64x8xf32, #tpu.memory_space<vmem>>, %arg7: memref<1x8xf32, #tpu.memory_space<vmem>>, %arg8: memref<128x8xf32, #tpu.memory_space<vmem>>) attributes {dimension_semantics = [#tpu.dimension_semantics<parallel>], iteration_bounds = array<i64: 1>, scalar_prefetch = 0 : i64, scratch_operands = 0 : i64, tpu.core_type = #tpu.core_type<tc>, window_params = [{transform_indices = @transform_0, window_bounds = array<i64: 128, 32>}, {pipeline_mode = #tpu.pipeline_mode<synchronous>, transform_indices = @transform_1, window_bounds = array<i64: 32, 64>}, {pipeline_mode = #tpu.pipeline_mode<synchronous>, transform_indices = @transform_2, window_bounds = array<i64: 1, 64>}, {pipeline_mode = #tpu.pipeline_mode<synchronous>, transform_indices = @transform_3, window_bounds = array<i64: 64, 64>}, {pipeline_mode = #tpu.pipeline_mode<synchronous>, transform_indices = @transform_4, window_bounds = array<i64: 1, 64>}, {pipeline_mode = #tpu.pipeline_mode<synchronous>, transform_indices = @transform_5, window_bounds = array<i64: 64, 8>}, {pipeline_mode = #tpu.pipeline_mode<synchronous>, transform_indices = @transform_6, window_bounds = array<i64: 1, 8>}, {transform_indices = @transform_7, window_bounds = array<i64: 128, 8>}]} {
    %c0 = arith.constant 0 : index
    %c0_0 = arith.constant 0 : index
    %0 = vector.load %arg1[%c0, %c0_0] : memref<128x32xf32, #tpu.memory_space<vmem>>, vector<128x32xf32>
    %c0_1 = arith.constant 0 : index
    %c0_2 = arith.constant 0 : index
    %1 = vector.load %arg2[%c0_1, %c0_2] : memref<32x64xf32, #tpu.memory_space<vmem>>, vector<32x64xf32>
    %cst = arith.constant dense<0.000000e+00> : vector<128x64xf32>
    %2 = tpu.matmul %0, %1, %cst {dimension_numbers = #tpu.dot_dimension_numbers<[1], [0], [0], [1], [0, 0, 1, 1], [], []>} : vector<128x32xf32>, vector<32x64xf32>, vector<128x64xf32> -> vector<128x64xf32>
    %c0_3 = arith.constant 0 : index
    %c0_4 = arith.constant 0 : index
    %3 = vector.load %arg3[%c0_3, %c0_4] : memref<1x64xf32, #tpu.memory_space<vmem>>, vector<1x64xf32>
    %4 = vector.broadcast %3 : vector<1x64xf32> to vector<128x64xf32>
    %5 = arith.addf %2, %4 : vector<128x64xf32>
    %cst_5 = arith.constant 0.000000e+00 : f32
    %6 = vector.broadcast %cst_5 : f32 to vector<128x64xf32>
    %7 = arith.maximumf %5, %6 : vector<128x64xf32>
    %c0_6 = arith.constant 0 : index
    %c0_7 = arith.constant 0 : index
    %8 = vector.load %arg4[%c0_6, %c0_7] : memref<64x64xf32, #tpu.memory_space<vmem>>, vector<64x64xf32>
    %cst_8 = arith.constant dense<0.000000e+00> : vector<128x64xf32>
    %9 = tpu.matmul %7, %8, %cst_8 {dimension_numbers = #tpu.dot_dimension_numbers<[1], [0], [0], [1], [0, 0, 1, 1], [], []>} : vector<128x64xf32>, vector<64x64xf32>, vector<128x64xf32> -> vector<128x64xf32>
    %c0_9 = arith.constant 0 : index
    %c0_10 = arith.constant 0 : index
    %10 = vector.load %arg5[%c0_9, %c0_10] : memref<1x64xf32, #tpu.memory_space<vmem>>, vector<1x64xf32>
    %11 = vector.broadcast %10 : vector<1x64xf32> to vector<128x64xf32>
    %12 = arith.addf %9, %11 : vector<128x64xf32>
    %cst_11 = arith.constant 0.000000e+00 : f32
    %13 = vector.broadcast %cst_11 : f32 to vector<128x64xf32>
    %14 = arith.maximumf %12, %13 : vector<128x64xf32>
    %c0_12 = arith.constant 0 : index
    %c0_13 = arith.constant 0 : index
    %15 = vector.load %arg6[%c0_12, %c0_13] : memref<64x8xf32, #tpu.memory_space<vmem>>, vector<64x8xf32>
    %cst_14 = arith.constant dense<0.000000e+00> : vector<128x8xf32>
    %16 = tpu.matmul %14, %15, %cst_14 {dimension_numbers = #tpu.dot_dimension_numbers<[1], [0], [0], [1], [0, 0, 1, 1], [], []>} : vector<128x64xf32>, vector<64x8xf32>, vector<128x8xf32> -> vector<128x8xf32>
    %c0_15 = arith.constant 0 : index
    %c0_16 = arith.constant 0 : index
    %17 = vector.load %arg7[%c0_15, %c0_16] : memref<1x8xf32, #tpu.memory_space<vmem>>, vector<1x8xf32>
    %18 = vector.broadcast %17 : vector<1x8xf32> to vector<128x8xf32>
    %19 = arith.addf %16, %18 : vector<128x8xf32>
    %c0_17 = arith.constant 0 : index
    %c0_18 = arith.constant 0 : index
    %20 = vector.load %arg8[%c0_17, %c0_18] : memref<128x8xf32, #tpu.memory_space<vmem>>, vector<128x8xf32>
    tpu.vector_store %arg8[%c0_17, %c0_18], %19 {strides = array<i32>} : memref<128x8xf32, #tpu.memory_space<vmem>>, vector<128x8xf32>,
    return
  }
  func.func @transform_0(%arg0: i32) -> (i32, i32) {
    %c0_i32 = arith.constant 0 : i32
    %c0_i32_0 = arith.constant 0 : i32
    return %arg0, %c0_i32 : i32, i32
  }
  func.func @transform_1(%arg0: i32) -> (i32, i32) {
    %c0_i32 = arith.constant 0 : i32
    %c0_i32_0 = arith.constant 0 : i32
    %c0_i32_1 = arith.constant 0 : i32
    return %c0_i32, %c0_i32_0 : i32, i32
  }
  func.func @transform_2(%arg0: i32) -> (i32, i32) {
    %c0_i32 = arith.constant 0 : i32
    %c0_i32_0 = arith.constant 0 : i32
    %c0_i32_1 = arith.constant 0 : i32
    return %c0_i32, %c0_i32_0 : i32, i32
  }
  func.func @transform_3(%arg0: i32) -> (i32, i32) {
    %c0_i32 = arith.constant 0 : i32
    %c0_i32_0 = arith.constant 0 : i32
    %c0_i32_1 = arith.constant 0 : i32
    return %c0_i32, %c0_i32_0 : i32, i32
  }
  func.func @transform_4(%arg0: i32) -> (i32, i32) {
    %c0_i32 = arith.constant 0 : i32
    %c0_i32_0 = arith.constant 0 : i32
    %c0_i32_1 = arith.constant 0 : i32
    return %c0_i32, %c0_i32_0 : i32, i32
  }
  func.func @transform_5(%arg0: i32) -> (i32, i32) {
    %c0_i32 = arith.constant 0 : i32
    %c0_i32_0 = arith.constant 0 : i32
    %c0_i32_1 = arith.constant 0 : i32
    return %c0_i32, %c0_i32_0 : i32, i32
  }
  func.func @transform_6(%arg0: i32) -> (i32, i32) {
    %c0_i32 = arith.constant 0 : i32
    %c0_i32_0 = arith.constant 0 : i32
    %c0_i32_1 = arith.constant 0 : i32
    return %c0_i32, %c0_i32_0 : i32, i32
  }
  func.func @transform_7(%arg0: i32) -> (i32, i32) {
    %c0_i32 = arith.constant 0 : i32
    %c0_i32_0 = arith.constant 0 : i32
    return %arg0, %c0_i32 : i32, i32
  }
}

</mosaic_0001>

<llo_original>
// kernel: bcnet_forward.1
$region0: #{bcnet_forward.1}
  #allocation0 [shape = 'u32[]', space=smem, size = 0x4, offset = 0x4, fixed_abs, tag = 'smem constant byte address 0x4 - core index']
  #allocation1 [shape = 'u32[144,128]{1,0:T(1,128)}', space=vmem, size = 0x12000, scoped, tag = 'internal scratch']
  %s0 = inlined_call_operand.vmem [shape: f32[8,32], index: 0, kind: input, shape index: {}]
  %s1 = inlined_call_operand.hbm [shape: f32[32,64], index: 1, kind: input, shape index: {}]
  %s2 = inlined_call_operand.vmem [shape: f32[1,64], index: 2, kind: input, shape index: {}]
  %s3 = inlined_call_operand.vmem [shape: f32[64,64], index: 3, kind: input, shape index: {}]
  %s4 = inlined_call_operand.vmem [shape: f32[1,64], index: 4, kind: input, shape index: {}]
  %s5 = inlined_call_operand.vmem [shape: f32[64,8], index: 5, kind: input, shape index: {}]
  %s6 = inlined_call_operand.vmem [shape: f32[1,8], index: 6, kind: input, shape index: {}]
  %s7 = inlined_call_operand.hbm [shape: f32[8,8], index: 7, kind: output, shape index: {}]
  %s8 = sld [smem:[#allocation0]]
  $region42: #{bcnet_forward.1} parent=0
    _
  %s10 = ssub.s32 1, %s8
  %s11 = scalar_select 0, %s10, %s8
  $region1: #{bcnet_forward.1} parent=0
    #allocation2 [shape = 'u8[16384]{0}', space=vmem, size = 0x4000, scoped, tag = 'input window, operand 1, single buffered']
    #allocation3 [shape = 's32[1]{0}', space=sflag, size = 0x4, scoped, tag = 'scoped memory for bcnet_forward.1']
    #allocation4 [shape = 's32[1]{0}', space=sflag, size = 0x4, scoped, tag = 'scoped memory for bcnet_forward.1']
    #allocation5 [shape = 'u8[65536]{0}', space=vmem, size = 0x10000, scoped, tag = 'output window, operand 0, single buffered']
    %12 = vsyncpa [#allocation3], 0
    %13 = vsyncpa [#allocation4], 0
    // Predicated region
    $region2: #{bcnet_forward.1} parent=1 // pred_check
      _
    $region3: #{bcnet_forward.1} parent=1 // pred_check_branch
      %15 = sbr.rel (0) target = $region5
    $region4: #{bcnet_forward.1} parent=1 // pred_region
      _
    $region5: #{bcnet_forward.1} parent=1 // pred_fallthru
      _
    // Predicated region
    $region6: #{bcnet_forward.1} parent=1 // pred_check
      _
    $region7: #{bcnet_forward.1} parent=1 // pred_check_branch
      %17 = sbr.rel (0) target = $region9
    $region8: #{bcnet_forward.1} parent=1 // pred_region
      %s19 = ssub.s32 512, 512
      %20 = vsyncadd [#allocation3], %s19
      %s21 = sshll.u32 [#allocation2], 4
      %s22 = int_to_ptr.vmem [resolvable:$true] %s21
      %27 = dma.hbm_to_vmem [thread:$0]  %s1, 512, %s22, [#allocation3], 128, 128, 8
    $region9: #{bcnet_forward.1} parent=1 // pred_fallthru
      _
    // Predicated region
    $region10: #{bcnet_forward.1} parent=1 // pred_check
      _
    $region11: #{bcnet_forward.1} parent=1 // pred_check_branch
      %29 = sbr.rel (0) target = $region13
    $region12: #{bcnet_forward.1} parent=1 // pred_region
      _
    $region13: #{bcnet_forward.1} parent=1 // pred_fallthru
      _
    // Predicated region
    $region14: #{bcnet_forward.1} parent=1 // pred_check
      _
    $region15: #{bcnet_forward.1} parent=1 // pred_check_branch
      %31 = sbr.rel (0) target = $region17
    $region16: #{bcnet_forward.1} parent=1 // pred_region
      _
    $region17: #{bcnet_forward.1} parent=1 // pred_fallthru
      _
    // Predicated region
    $region18: #{bcnet_forward.1} parent=1 // pred_check
      _
    $region19: #{bcnet_forward.1} parent=1 // pred_check_branch
      %33 = sbr.rel (0) target = $region21
    $region20: #{bcnet_forward.1} parent=1 // pred_region
      _
    $region21: #{bcnet_forward.1} parent=1 // pred_fallthru
      _
    // Predicated region
    $region22: #{bcnet_forward.1} parent=1 // pred_check
      _
    $region23: #{bcnet_forward.1} parent=1 // pred_check_branch
      %35 = sbr.rel (0) target = $region25
    $region24: #{bcnet_forward.1} parent=1 // pred_region
      _
    $region25: #{bcnet_forward.1} parent=1 // pred_fallthru
      _
    // Predicated region
    $region26: #{bcnet_forward.1} parent=1 // pred_check
      _
    $region27: #{bcnet_forward.1} parent=1 // pred_check_branch
      %37 = sbr.rel (0) target = $region29
    $region28: #{bcnet_forward.1} parent=1 // pred_region
      _
    $region29: #{bcnet_forward.1} parent=1 // pred_fallthru
      _
    // Predicated region
    $region30: #{bcnet_forward.1} parent=1 // pred_check
      _
    $region31: #{bcnet_forward.1} parent=1 // pred_check_branch
      %39 = sbr.rel (0) target = $region33
    $region32: #{bcnet_forward.1} parent=1 // pred_region
      %40 = dma.done [#allocation3], 512
    $region33: #{bcnet_forward.1} parent=1 // pred_fallthru
      _
    %v41 = vld [vmem:[%s0] sm:$0xff]
    %v42 = vld [vmem:[%s0 + $0x8] sm:$0xff]
    %v43 = vld [vmem:[%s0 + $0x10] sm:$0xff]
    %v44 = vld [vmem:[%s0 + $0x18] sm:$0xff]
    %v45 = vld [vmem:[%s0 + $0x20] sm:$0xff]
    %v46 = vld [vmem:[%s0 + $0x28] sm:$0xff]
    %v47 = vld [vmem:[%s0 + $0x30] sm:$0xff]
    %v48 = vld [vmem:[%s0 + $0x38] sm:$0xff]
    %v49 = vld [vmem:[%s0 + $0x40] sm:$0xff]
    %v50 = vld [vmem:[%s0 + $0x48] sm:$0xff]
    %v51 = vld [vmem:[%s0 + $0x50] sm:$0xff]
    %v52 = vld [vmem:[%s0 + $0x58] sm:$0xff]
    %v53 = vld [vmem:[%s0 + $0x60] sm:$0xff]
    %v54 = vld [vmem:[%s0 + $0x68] sm:$0xff]
    %v55 = vld [vmem:[%s0 + $0x70] sm:$0xff]
    %v56 = vld [vmem:[%s0 + $0x78] sm:$0xff]
    %v57 = vld [vmem:[#allocation2] sm:$0xff]
    %v58 = vld [vmem:[#allocation2 + $0x8] sm:$0xff]
    %v59 = vld [vmem:[#allocation2 + $0x10] sm:$0xff]
    %v60 = vld [vmem:[#allocation2 + $0x18] sm:$0xff]
    %v61 = vld [vmem:[%s2] sm:$0x1]
    %v63 = vlaneseq
    %v64 = vshrl.u32 %v63, 7
    %v65 = vsub.s32 0, %v64
    %v66 = vrot.slane %v61, %v65
    %vm68 = vcmask 261120
    %v70 = vsel %vm68, %v41, 0
    %v73 = vsel %vm68, %v42, 0
    %v76 = vsel %vm68, %v43, 0
    %v79 = vsel %vm68, %v44, 0
    %v82 = vsel %vm68, %v45, 0
    %v85 = vsel %vm68, %v46, 0
    %v88 = vsel %vm68, %v47, 0
    %v91 = vsel %vm68, %v48, 0
    %v94 = vsel %vm68, %v49, 0
    %v97 = vsel %vm68, %v50, 0
    %v100 = vsel %vm68, %v51, 0
    %v103 = vsel %vm68, %v52, 0
    %v106 = vsel %vm68, %v53, 0
    %v109 = vsel %vm68, %v54, 0
    %v112 = vsel %vm68, %v55, 0
    %v115 = vsel %vm68, %v56, 0
    %117 = vmatprep.subr.mxu0 0.0
    %118 = vmatpush1.msra.mxu0 %v57
    %119 = vmatprep.subr.mxu0 0.0
    %120 = vmatpush1.msra.mxu0 %v58
    %121 = vmatprep.subr.mxu0 0.0
    %122 = vmatpush1.msra.mxu0 %v59
    %123 = vmatprep.subr.mxu0 0.0
    %124 = vmatpush1.msra.mxu0 %v60
    %125 = vmatprep.subr.mxu0 0.0
    %126 = vmatpush1.msra.mxu0 0.0
    %127 = vmatprep.subr.mxu0 0.0
    %128 = vmatpush1.msra.mxu0 0.0
    %129 = vmatprep.subr.mxu0 0.0
    %130 = vmatpush1.msra.mxu0 0.0
    %131 = vmatprep.subr.mxu0 0.0
    %132 = vmatpush1.msra.mxu0 0.0
    %133 = vmatprep.subr.mxu0 0.0
    %134 = vmatpush1.msra.mxu0 0.0
    %135 = vmatprep.subr.mxu0 0.0
    %136 = vmatpush1.msra.mxu0 0.0
    %137 = vmatprep.subr.mxu0 0.0
    %138 = vmatpush1.msra.mxu0 0.0
    %139 = vmatprep.subr.mxu0 0.0
    %140 = vmatpush1.msra.mxu0 0.0
    %141 = vmatprep.subr.mxu0 0.0
    %142 = vmatpush1.msra.mxu0 0.0
    %143 = vmatprep.subr.mxu0 0.0
    %144 = vmatpush1.msra.mxu0 0.0
    %145 = vmatprep.subr.mxu0 0.0
    %146 = vmatpush1.msra.mxu0 0.0
    %147 = vmatprep.subr.mxu0 0.0
    %148 = vmatpush1.msra.mxu0 0.0
    %149 = vmatprep.subr.mxu0 0.0
    %150 = vmatpush1.msra.mxu0 0.0
    %151 = vmatprep.subr.mxu0 0.0
    %152 = vmatpush1.msra.mxu0 0.0
    %153 = vmatprep.subr.mxu0 0.0
    %154 = vmatpush1.msra.mxu0 0.0
    %155 = vmatprep.subr.mxu0 0.0
    %156 = vmatpush1.msra.mxu0 0.0
    %157 = vmatprep.subr.mxu0 0.0
    %158 = vmatpush1.msra.mxu0 0.0
    %159 = vmatprep.subr.mxu0 0.0
    %160 = vmatpush1.msra.mxu0 0.0
    %161 = vmatprep.subr.mxu0 0.0
    %162 = vmatpush1.msra.mxu0 0.0
    %163 = vmatprep.subr.mxu0 0.0
    %164 = vmatpush1.msra.mxu0 0.0
    %165 = vmatprep.subr.mxu0 0.0
    %166 = vmatpush1.msra.mxu0 0.0
    %167 = vmatprep.subr.mxu0 0.0
    %168 = vmatpush1.msra.mxu0 0.0
    %169 = vmatprep.subr.mxu0 0.0
    %170 = vmatpush1.msra.mxu0 0.0
    %171 = vmatprep.subr.mxu0 0.0
    %172 = vmatpush1.msra.mxu0 0.0
    %173 = vmatprep.subr.mxu0 0.0
    %174 = vmatpush1.msra.mxu0 0.0
    %175 = vmatprep.subr.mxu0 0.0
    %176 = vmatpush1.msra.mxu0 0.0
    %177 = vmatprep.subr.mxu0 0.0
    %178 = vmatpush1.msra.mxu0 0.0
    %179 = vmatprep.subr.mxu0 0.0
    %180 = vmatpush1.msra.mxu0 0.0
    %181 = vmatprep.mubr.f32.mxu0 0.0
    %182 = vmatmul.mubr.f32.gmra.mrb[0].mxu0 %v70
    %v183 = vpop.f32.mrb[0].mxu0
    %v184 = vadd.f32 %v66, %v183
    %v185 = vpop.f32.mrb[0].mxu0
    %186 = vmatprep.mubr.f32.mxu0 0.0
    %187 = vmatmul.mubr.f32.gmra.mrb[0].mxu0 %v73
    %v188 = vpop.f32.mrb[0].mxu0
    %v189 = vadd.f32 %v66, %v188
    %v190 = vpop.f32.mrb[0].mxu0
    %191 = vmatprep.mubr.f32.mxu0 0.0
    %192 = vmatmul.mubr.f32.gmra.mrb[0].mxu0 %v76
    %v193 = vpop.f32.mrb[0].mxu0
    %v194 = vadd.f32 %v66, %v193
    %v195 = vpop.f32.mrb[0].mxu0
    %196 = vmatprep.mubr.f32.mxu0 0.0
    %197 = vmatmul.mubr.f32.gmra.mrb[0].mxu0 %v79
    %v198 = vpop.f32.mrb[0].mxu0
    %v199 = vadd.f32 %v66, %v198
    %v200 = vpop.f32.mrb[0].mxu0
    %201 = vmatprep.mubr.f32.mxu0 0.0
    %202 = vmatmul.mubr.f32.gmra.mrb[0].mxu0 %v82
    %v203 = vpop.f32.mrb[0].mxu0
    %v204 = vadd.f32 %v66, %v203
    %v205 = vpop.f32.mrb[0].mxu0
    %206 = vmatprep.mubr.f32.mxu0 0.0
    %207 = vmatmul.mubr.f32.gmra.mrb[0].mxu0 %v85
    %v208 = vpop.f32.mrb[0].mxu0
    %v209 = vadd.f32 %v66, %v208
    %v210 = vpop.f32.mrb[0].mxu0
    %211 = vmatprep.mubr.f32.mxu0 0.0
    %212 = vmatmul.mubr.f32.gmra.mrb[0].mxu0 %v88
    %v213 = vpop.f32.mrb[0].mxu0
    %v214 = vadd.f32 %v66, %v213
    %v215 = vpop.f32.mrb[0].mxu0
    %216 = vmatprep.mubr.f32.mxu0 0.0
    %217 = vmatmul.mubr.f32.gmra.mrb[0].mxu0 %v91
    %v218 = vpop.f32.mrb[0].mxu0
    %v219 = vadd.f32 %v66, %v218
    %v220 = vpop.f32.mrb[0].mxu0
    %221 = vmatprep.mubr.f32.mxu0 0.0
    %222 = vmatmul.mubr.f32.gmra.mrb[0].mxu0 %v94
    %v223 = vpop.f32.mrb[0].mxu0
    %v224 = vadd.f32 %v66, %v223
    %v225 = vpop.f32.mrb[0].mxu0
    %226 = vmatprep.mubr.f32.mxu0 0.0
    %227 = vmatmul.mubr.f32.gmra.mrb[0].mxu0 %v97
    %v228 = vpop.f32.mrb[0].mxu0
    %v229 = vadd.f32 %v66, %v228
    %v230 = vpop.f32.mrb[0].mxu0
    %231 = vmatprep.mubr.f32.mxu0 0.0
    %232 = vmatmul.mubr.f32.gmra.mrb[0].mxu0 %v100
    %v233 = vpop.f32.mrb[0].mxu0
    %v234 = vadd.f32 %v66, %v233
    %v235 = vpop.f32.mrb[0].mxu0
    %236 = vmatprep.mubr.f32.mxu0 0.0
    %237 = vmatmul.mubr.f32.gmra.mrb[0].mxu0 %v103
    %v238 = vpop.f32.mrb[0].mxu0
    %v239 = vadd.f32 %v66, %v238
    %v240 = vpop.f32.mrb[0].mxu0
    %241 = vmatprep.mubr.f32.mxu0 0.0
    %242 = vmatmul.mubr.f32.gmra.mrb[0].mxu0 %v106
    %v243 = vpop.f32.mrb[0].mxu0
    %v244 = vadd.f32 %v66, %v243
    %v245 = vpop.f32.mrb[0].mxu0
    %246 = vmatprep.mubr.f32.mxu0 0.0
    %247 = vmatmul.mubr.f32.gmra.mrb[0].mxu0 %v109
    %v248 = vpop.f32.mrb[0].mxu0
    %v249 = vadd.f32 %v66, %v248
    %v250 = vpop.f32.mrb[0].mxu0
    %251 = vmatprep.mubr.f32.mxu0 0.0
    %252 = vmatmul.mubr.f32.gmra.mrb[0].mxu0 %v112
    %v253 = vpop.f32.mrb[0].mxu0
    %v254 = vadd.f32 %v66, %v253
    %v255 = vpop.f32.mrb[0].mxu0
    %256 = vmatprep.mubr.f32.mxu0 0.0
    %257 = vmatmul.mubr.f32.gmra.mrb[0].mxu0 %v115
    %v258 = vpop.f32.mrb[0].mxu0
    %v259 = vadd.f32 %v66, %v258
    %v260 = vpop.f32.mrb[0].mxu0
    %261 = vdwg.mxu0
    %v262 = vmax.f32 %v184, 0.0
    %v263 = vmax.f32 %v189, 0.0
    %v264 = vmax.f32 %v194, 0.0
    %v265 = vmax.f32 %v199, 0.0
    %v266 = vmax.f32 %v204, 0.0
    %v267 = vmax.f32 %v209, 0.0
    %v268 = vmax.f32 %v214, 0.0
    %v269 = vmax.f32 %v219, 0.0
    %v270 = vmax.f32 %v224, 0.0
    %v271 = vmax.f32 %v229, 0.0
    %v272 = vmax.f32 %v234, 0.0
    %v273 = vmax.f32 %v239, 0.0
    %v274 = vmax.f32 %v244, 0.0
    %v275 = vmax.f32 %v249, 0.0
    %v276 = vmax.f32 %v254, 0.0
    %v277 = vmax.f32 %v259, 0.0
    %v278 = vld [vmem:[%s3] sm:$0xff]
    %v279 = vld [vmem:[%s3 + $0x8] sm:$0xff]
    %v280 = vld [vmem:[%s3 + $0x10] sm:$0xff]
    %v281 = vld [vmem:[%s3 + $0x18] sm:$0xff]
    %v282 = vld [vmem:[%s3 + $0x20] sm:$0xff]
    %v283 = vld [vmem:[%s3 + $0x28] sm:$0xff]
    %v284 = vld [vmem:[%s3 + $0x30] sm:$0xff]
    %v285 = vld [vmem:[%s3 + $0x38] sm:$0xff]
    %v286 = vld [vmem:[%s4] sm:$0x1]
    %v288 = vlaneseq
    %v289 = vshrl.u32 %v288, 7
    %v290 = vsub.s32 0, %v289
    %v291 = vrot.slane %v286, %v290
    %vm293 = vcmask 523264
    %v295 = vsel %vm293, %v262, 0
    %v298 = vsel %vm293, %v263, 0
    %v301 = vsel %vm293, %v264, 0
    %v304 = vsel %vm293, %v265, 0
    %v307 = vsel %vm293, %v266, 0
    %v310 = vsel %vm293, %v267, 0
    %v313 = vsel %vm293, %v268, 0
    %v316 = vsel %vm293, %v269, 0
    %v319 = vsel %vm293, %v270, 0
    %v322 = vsel %vm293, %v271, 0
    %v325 = vsel %vm293, %v272, 0
    %v328 = vsel %vm293, %v273, 0
    %v331 = vsel %vm293, %v274, 0
    %v334 = vsel %vm293, %v275, 0
    %v337 = vsel %vm293, %v276, 0
    %v340 = vsel %vm293, %v277, 0
    %342 = vmatprep.subr.mxu0 0.0
    %343 = vmatpush1.msra.mxu0 %v278
    %344 = vmatprep.subr.mxu0 0.0
    %345 = vmatpush1.msra.mxu0 %v279
    %346 = vmatprep.subr.mxu0 0.0
    %347 = vmatpush1.msra.mxu0 %v280
    %348 = vmatprep.subr.mxu0 0.0
    %349 = vmatpush1.msra.mxu0 %v281
    %350 = vmatprep.subr.mxu0 0.0
    %351 = vmatpush1.msra.mxu0 %v282
    %352 = vmatprep.subr.mxu0 0.0
    %353 = vmatpush1.msra.mxu0 %v283
    %354 = vmatprep.subr.mxu0 0.0
    %355 = vmatpush1.msra.mxu0 %v284
    %356 = vmatprep.subr.mxu0 0.0
    %357 = vmatpush1.msra.mxu0 %v285
    %358 = vmatprep.subr.mxu0 0.0
    %359 = vmatpush1.msra.mxu0 0.0
    %360 = vmatprep.subr.mxu0 0.0
    %361 = vmatpush1.msra.mxu0 0.0
    %362 = vmatprep.subr.mxu0 0.0
    %363 = vmatpush1.msra.mxu0 0.0
    %364 = vmatprep.subr.mxu0 0.0
    %365 = vmatpush1.msra.mxu0 0.0
    %366 = vmatprep.subr.mxu0 0.0
    %367 = vmatpush1.msra.mxu0 0.0
    %368 = vmatprep.subr.mxu0 0.0
    %369 = vmatpush1.msra.mxu0 0.0
    %370 = vmatprep.subr.mxu0 0.0
    %371 = vmatpush1.msra.mxu0 0.0
    %372 = vmatprep.subr.mxu0 0.0
    %373 = vmatpush1.msra.mxu0 0.0
    %374 = vmatprep.subr.mxu0 0.0
    %375 = vmatpush1.msra.mxu0 0.0
    %376 = vmatprep.subr.mxu0 0.0
    %377 = vmatpush1.msra.mxu0 0.0
    %378 = vmatprep.subr.mxu0 0.0
    %379 = vmatpush1.msra.mxu0 0.0
    %380 = vmatprep.subr.mxu0 0.0
    %381 = vmatpush1.msra.mxu0 0.0
    %382 = vmatprep.subr.mxu0 0.0
    %383 = vmatpush1.msra.mxu0 0.0
    %384 = vmatprep.subr.mxu0 0.0
    %385 = vmatpush1.msra.mxu0 0.0
    %386 = vmatprep.subr.mxu0 0.0
    %387 = vmatpush1.msra.mxu0 0.0
    %388 = vmatprep.subr.mxu0 0.0
    %389 = vmatpush1.msra.mxu0 0.0
    %390 = vmatprep.subr.mxu0 0.0
    %391 = vmatpush1.msra.mxu0 0.0
    %392 = vmatprep.subr.mxu0 0.0
    %393 = vmatpush1.msra.mxu0 0.0
    %394 = vmatprep.subr.mxu0 0.0
    %395 = vmatpush1.msra.mxu0 0.0
    %396 = vmatprep.subr.mxu0 0.0
    %397 = vmatpush1.msra.mxu0 0.0
    %398 = vmatprep.subr.mxu0 0.0
    %399 = vmatpush1.msra.mxu0 0.0
    %400 = vmatprep.subr.mxu0 0.0
    %401 = vmatpush1.msra.mxu0 0.0
    %402 = vmatprep.subr.mxu0 0.0
    %403 = vmatpush1.msra.mxu0 0.0
    %404 = vmatprep.subr.mxu0 0.0
    %405 = vmatpush1.msra.mxu0 0.0
    %406 = vmatprep.mubr.f32.mxu0 0.0
    %407 = vmatmul.mubr.f32.gmra.mrb[0].mxu0 %v295
    %v408 = vpop.f32.mrb[0].mxu0
    %v409 = vadd.f32 %v291, %v408
    %v410 = vpop.f32.mrb[0].mxu0
    %411 = vmatprep.mubr.f32.mxu0 0.0
    %412 = vmatmul.mubr.f32.gmra.mrb[0].mxu0 %v298
    %v413 = vpop.f32.mrb[0].mxu0
    %v414 = vadd.f32 %v291, %v413
    %v415 = vpop.f32.mrb[0].mxu0
    %416 = vmatprep.mubr.f32.mxu0 0.0
    %417 = vmatmul.mubr.f32.gmra.mrb[0].mxu0 %v301
    %v418 = vpop.f32.mrb[0].mxu0
    %v419 = vadd.f32 %v291, %v418
    %v420 = vpop.f32.mrb[0].mxu0
    %421 = vmatprep.mubr.f32.mxu0 0.0
    %422 = vmatmul.mubr.f32.gmra.mrb[0].mxu0 %v304
    %v423 = vpop.f32.mrb[0].mxu0
    %v424 = vadd.f32 %v291, %v423
    %v425 = vpop.f32.mrb[0].mxu0
    %426 = vmatprep.mubr.f32.mxu0 0.0
    %427 = vmatmul.mubr.f32.gmra.mrb[0].mxu0 %v307
    %v428 = vpop.f32.mrb[0].mxu0
    %v429 = vadd.f32 %v291, %v428
    %v430 = vpop.f32.mrb[0].mxu0
    %431 = vmatprep.mubr.f32.mxu0 0.0
    %432 = vmatmul.mubr.f32.gmra.mrb[0].mxu0 %v310
    %v433 = vpop.f32.mrb[0].mxu0
    %v434 = vadd.f32 %v291, %v433
    %v435 = vpop.f32.mrb[0].mxu0
    %436 = vmatprep.mubr.f32.mxu0 0.0
    %437 = vmatmul.mubr.f32.gmra.mrb[0].mxu0 %v313
    %v438 = vpop.f32.mrb[0].mxu0
    %v439 = vadd.f32 %v291, %v438
    %v440 = vpop.f32.mrb[0].mxu0
    %441 = vmatprep.mubr.f32.mxu0 0.0
    %442 = vmatmul.mubr.f32.gmra.mrb[0].mxu0 %v316
    %v443 = vpop.f32.mrb[0].mxu0
    %v444 = vadd.f32 %v291, %v443
    %v445 = vpop.f32.mrb[0].mxu0
    %446 = vmatprep.mubr.f32.mxu0 0.0
    %447 = vmatmul.mubr.f32.gmra.mrb[0].mxu0 %v319
    %v448 = vpop.f32.mrb[0].mxu0
    %v449 = vadd.f32 %v291, %v448
    %v450 = vpop.f32.mrb[0].mxu0
    %451 = vmatprep.mubr.f32.mxu0 0.0
    %452 = vmatmul.mubr.f32.gmra.mrb[0].mxu0 %v322
    %v453 = vpop.f32.mrb[0].mxu0
    %v454 = vadd.f32 %v291, %v453
    %v455 = vpop.f32.mrb[0].mxu0
    %456 = vmatprep.mubr.f32.mxu0 0.0
    %457 = vmatmul.mubr.f32.gmra.mrb[0].mxu0 %v325
    %v458 = vpop.f32.mrb[0].mxu0
    %v459 = vadd.f32 %v291, %v458
    %v460 = vpop.f32.mrb[0].mxu0
    %461 = vmatprep.mubr.f32.mxu0 0.0
    %462 = vmatmul.mubr.f32.gmra.mrb[0].mxu0 %v328
    %v463 = vpop.f32.mrb[0].mxu0
    %v464 = vadd.f32 %v291, %v463
    %v465 = vpop.f32.mrb[0].mxu0
    %466 = vmatprep.mubr.f32.mxu0 0.0
    %467 = vmatmul.mubr.f32.gmra.mrb[0].mxu0 %v331
    %v468 = vpop.f32.mrb[0].mxu0
    %v469 = vadd.f32 %v291, %v468
    %v470 = vpop.f32.mrb[0].mxu0
    %471 = vmatprep.mubr.f32.mxu0 0.0
    %472 = vmatmul.mubr.f32.gmra.mrb[0].mxu0 %v334
    %v473 = vpop.f32.mrb[0].mxu0
    %v474 = vadd.f32 %v291, %v473
    %v475 = vpop.f32.mrb[0].mxu0
    %476 = vmatprep.mubr.f32.mxu0 0.0
    %477 = vmatmul.mubr.f32.gmra.mrb[0].mxu0 %v337
    %v478 = vpop.f32.mrb[0].mxu0
    %v479 = vadd.f32 %v291, %v478
    %v480 = vpop.f32.mrb[0].mxu0
    %481 = vmatprep.mubr.f32.mxu0 0.0
    %482 = vmatmul.mubr.f32.gmra.mrb[0].mxu0 %v340
    %v483 = vpop.f32.mrb[0].mxu0
    %v484 = vadd.f32 %v291, %v483
    %v485 = vpop.f32.mrb[0].mxu0
    %486 = vdwg.mxu0
    %v487 = vmax.f32 %v409, 0.0
    %v488 = vmax.f32 %v414, 0.0
    %v489 = vmax.f32 %v419, 0.0
    %v490 = vmax.f32 %v424, 0.0
    %v491 = vmax.f32 %v429, 0.0
    %v492 = vmax.f32 %v434, 0.0
    %v493 = vmax.f32 %v439, 0.0
    %v494 = vmax.f32 %v444, 0.0
    %v495 = vmax.f32 %v449, 0.0
    %v496 = vmax.f32 %v454, 0.0
    %v497 = vmax.f32 %v459, 0.0
    %v498 = vmax.f32 %v464, 0.0
    %v499 = vmax.f32 %v469, 0.0
    %v500 = vmax.f32 %v474, 0.0
    %v501 = vmax.f32 %v479, 0.0
    %v502 = vmax.f32 %v484, 0.0
    %v503 = vld [vmem:[%s5] sm:$0xff]
    %v504 = vld [vmem:[%s5 + $0x8] sm:$0xff]
    %v505 = vld [vmem:[%s5 + $0x10] sm:$0xff]
    %v506 = vld [vmem:[%s5 + $0x18] sm:$0xff]
    %v507 = vld [vmem:[%s5 + $0x20] sm:$0xff]
    %v508 = vld [vmem:[%s5 + $0x28] sm:$0xff]
    %v509 = vld [vmem:[%s5 + $0x30] sm:$0xff]
    %v510 = vld [vmem:[%s5 + $0x38] sm:$0xff]
    %v511 = vld [vmem:[%s6] sm:$0x1]
    %v513 = vlaneseq
    %v514 = vshrl.u32 %v513, 7
    %v515 = vsub.s32 0, %v514
    %v516 = vrot.slane %v511, %v515
    %v519 = vsel %vm293, %v487, 0
    %v522 = vsel %vm293, %v488, 0
    %v525 = vsel %vm293, %v489, 0
    %v528 = vsel %vm293, %v490, 0
    %v531 = vsel %vm293, %v491, 0
    %v534 = vsel %vm293, %v492, 0
    %v537 = vsel %vm293, %v493, 0
    %v540 = vsel %vm293, %v494, 0
    %v543 = vsel %vm293, %v495, 0
    %v546 = vsel %vm293, %v496, 0
    %v549 = vsel %vm293, %v497, 0
    %v552 = vsel %vm293, %v498, 0
    %v555 = vsel %vm293, %v499, 0
    %v558 = vsel %vm293, %v500, 0
    %v561 = vsel %vm293, %v501, 0
    %v564 = vsel %vm293, %v502, 0
    %566 = vmatprep.subr.mxu0 0.0
    %567 = vmatpush1.msra.mxu0 %v503
    %568 = vmatprep.subr.mxu0 0.0
    %569 = vmatpush1.msra.mxu0 %v504
    %570 = vmatprep.subr.mxu0 0.0
    %571 = vmatpush1.msra.mxu0 %v505
    %572 = vmatprep.subr.mxu0 0.0
    %573 = vmatpush1.msra.mxu0 %v506
    %574 = vmatprep.subr.mxu0 0.0
    %575 = vmatpush1.msra.mxu0 %v507
    %576 = vmatprep.subr.mxu0 0.0
    %577 = vmatpush1.msra.mxu0 %v508
    %578 = vmatprep.subr.mxu0 0.0
    %579 = vmatpush1.msra.mxu0 %v509
    %580 = vmatprep.subr.mxu0 0.0
    %581 = vmatpush1.msra.mxu0 %v510
    %582 = vmatprep.subr.mxu0 0.0
    %583 = vmatpush1.msra.mxu0 0.0
    %584 = vmatprep.subr.mxu0 0.0
    %585 = vmatpush1.msra.mxu0 0.0
    %586 = vmatprep.subr.mxu0 0.0
    %587 = vmatpush1.msra.mxu0 0.0
    %588 = vmatprep.subr.mxu0 0.0
    %589 = vmatpush1.msra.mxu0 0.0
    %590 = vmatprep.subr.mxu0 0.0
    %591 = vmatpush1.msra.mxu0 0.0
    %592 = vmatprep.subr.mxu0 0.0
    %593 = vmatpush1.msra.mxu0 0.0
    %594 = vmatprep.subr.mxu0 0.0
    %595 = vmatpush1.msra.mxu0 0.0
    %596 = vmatprep.subr.mxu0 0.0
    %597 = vmatpush1.msra.mxu0 0.0
    %598 = vmatprep.subr.mxu0 0.0
    %599 = vmatpush1.msra.mxu0 0.0
    %600 = vmatprep.subr.mxu0 0.0
    %601 = vmatpush1.msra.mxu0 0.0
    %602 = vmatprep.subr.mxu0 0.0
    %603 = vmatpush1.msra.mxu0 0.0
    %604 = vmatprep.subr.mxu0 0.0
    %605 = vmatpush1.msra.mxu0 0.0
    %606 = vmatprep.subr.mxu0 0.0
    %607 = vmatpush1.msra.mxu0 0.0
    %608 = vmatprep.subr.mxu0 0.0
    %609 = vmatpush1.msra.mxu0 0.0
    %610 = vmatprep.subr.mxu0 0.0
    %611 = vmatpush1.msra.mxu0 0.0
    %612 = vmatprep.subr.mxu0 0.0
    %613 = vmatpush1.msra.mxu0 0.0
    %614 = vmatprep.subr.mxu0 0.0
    %615 = vmatpush1.msra.mxu0 0.0
    %616 = vmatprep.subr.mxu0 0.0
    %617 = vmatpush1.msra.mxu0 0.0
    %618 = vmatprep.subr.mxu0 0.0
    %619 = vmatpush1.msra.mxu0 0.0
    %620 = vmatprep.subr.mxu0 0.0
    %621 = vmatpush1.msra.mxu0 0.0
    %622 = vmatprep.subr.mxu0 0.0
    %623 = vmatpush1.msra.mxu0 0.0
    %624 = vmatprep.subr.mxu0 0.0
    %625 = vmatpush1.msra.mxu0 0.0
    %626 = vmatprep.subr.mxu0 0.0
    %627 = vmatpush1.msra.mxu0 0.0
    %628 = vmatprep.subr.mxu0 0.0
    %629 = vmatpush1.msra.mxu0 0.0
    %630 = vmatprep.mubr.f32.mxu0 0.0
    %631 = vmatmul.mubr.f32.gmra.mrb[0].mxu0 %v519
    %v632 = vpop.f32.mrb[0].mxu0
    %v633 = vadd.f32 %v516, %v632
    %v634 = vpop.f32.mrb[0].mxu0
    %635 = vmatprep.mubr.f32.mxu0 0.0
    %636 = vmatmul.mubr.f32.gmra.mrb[0].mxu0 %v522
    %v637 = vpop.f32.mrb[0].mxu0
    %v638 = vadd.f32 %v516, %v637
    %v639 = vpop.f32.mrb[0].mxu0
    %640 = vmatprep.mubr.f32.mxu0 0.0
    %641 = vmatmul.mubr.f32.gmra.mrb[0].mxu0 %v525
    %v642 = vpop.f32.mrb[0].mxu0
    %v643 = vadd.f32 %v516, %v642
    %v644 = vpop.f32.mrb[0].mxu0
    %645 = vmatprep.mubr.f32.mxu0 0.0
    %646 = vmatmul.mubr.f32.gmra.mrb[0].mxu0 %v528
    %v647 = vpop.f32.mrb[0].mxu0
    %v648 = vadd.f32 %v516, %v647
    %v649 = vpop.f32.mrb[0].mxu0
    %650 = vmatprep.mubr.f32.mxu0 0.0
    %651 = vmatmul.mubr.f32.gmra.mrb[0].mxu0 %v531
    %v652 = vpop.f32.mrb[0].mxu0
    %v653 = vadd.f32 %v516, %v652
    %v654 = vpop.f32.mrb[0].mxu0
    %655 = vmatprep.mubr.f32.mxu0 0.0
    %656 = vmatmul.mubr.f32.gmra.mrb[0].mxu0 %v534
    %v657 = vpop.f32.mrb[0].mxu0
    %v658 = vadd.f32 %v516, %v657
    %v659 = vpop.f32.mrb[0].mxu0
    %660 = vmatprep.mubr.f32.mxu0 0.0
    %661 = vmatmul.mubr.f32.gmra.mrb[0].mxu0 %v537
    %v662 = vpop.f32.mrb[0].mxu0
    %v663 = vadd.f32 %v516, %v662
    %v664 = vpop.f32.mrb[0].mxu0
    %665 = vmatprep.mubr.f32.mxu0 0.0
    %666 = vmatmul.mubr.f32.gmra.mrb[0].mxu0 %v540
    %v667 = vpop.f32.mrb[0].mxu0
    %v668 = vadd.f32 %v516, %v667
    %v669 = vpop.f32.mrb[0].mxu0
    %670 = vmatprep.mubr.f32.mxu0 0.0
    %671 = vmatmul.mubr.f32.gmra.mrb[0].mxu0 %v543
    %v672 = vpop.f32.mrb[0].mxu0
    %v673 = vadd.f32 %v516, %v672
    %v674 = vpop.f32.mrb[0].mxu0
    %675 = vmatprep.mubr.f32.mxu0 0.0
    %676 = vmatmul.mubr.f32.gmra.mrb[0].mxu0 %v546
    %v677 = vpop.f32.mrb[0].mxu0
    %v678 = vadd.f32 %v516, %v677
    %v679 = vpop.f32.mrb[0].mxu0
    %680 = vmatprep.mubr.f32.mxu0 0.0
    %681 = vmatmul.mubr.f32.gmra.mrb[0].mxu0 %v549
    %v682 = vpop.f32.mrb[0].mxu0
    %v683 = vadd.f32 %v516, %v682
    %v684 = vpop.f32.mrb[0].mxu0
    %685 = vmatprep.mubr.f32.mxu0 0.0
    %686 = vmatmul.mubr.f32.gmra.mrb[0].mxu0 %v552
    %v687 = vpop.f32.mrb[0].mxu0
    %v688 = vadd.f32 %v516, %v687
    %v689 = vpop.f32.mrb[0].mxu0
    %690 = vmatprep.mubr.f32.mxu0 0.0
    %691 = vmatmul.mubr.f32.gmra.mrb[0].mxu0 %v555
    %v692 = vpop.f32.mrb[0].mxu0
    %v693 = vadd.f32 %v516, %v692
    %v694 = vpop.f32.mrb[0].mxu0
    %695 = vmatprep.mubr.f32.mxu0 0.0
    %696 = vmatmul.mubr.f32.gmra.mrb[0].mxu0 %v558
    %v697 = vpop.f32.mrb[0].mxu0
    %v698 = vadd.f32 %v516, %v697
    %v699 = vpop.f32.mrb[0].mxu0
    %700 = vmatprep.mubr.f32.mxu0 0.0
    %701 = vmatmul.mubr.f32.gmra.mrb[0].mxu0 %v561
    %v702 = vpop.f32.mrb[0].mxu0
    %v703 = vadd.f32 %v516, %v702
    %v704 = vpop.f32.mrb[0].mxu0
    %705 = vmatprep.mubr.f32.mxu0 0.0
    %706 = vmatmul.mubr.f32.gmra.mrb[0].mxu0 %v564
    %v707 = vpop.f32.mrb[0].mxu0
    %v708 = vadd.f32 %v516, %v707
    %v709 = vpop.f32.mrb[0].mxu0
    %710 = vdwg.mxu0
    %vm711 = vcmask 64512
    %712 = vst.msk [vmem:[#allocation5] sm:$0xff] %vm711, %v633
    %713 = vst.msk [vmem:[#allocation5 + $0x8] sm:$0xff] %vm711, %v638
    %714 = vst.msk [vmem:[#allocation5 + $0x10] sm:$0xff] %vm711, %v643
    %715 = vst.msk [vmem:[#allocation5 + $0x18] sm:$0xff] %vm711, %v648
    %716 = vst.msk [vmem:[#allocation5 + $0x20] sm:$0xff] %vm711, %v653
    %717 = vst.msk [vmem:[#allocation5 + $0x28] sm:$0xff] %vm711, %v658
    %718 = vst.msk [vmem:[#allocation5 + $0x30] sm:$0xff] %vm711, %v663
    %719 = vst.msk [vmem:[#allocation5 + $0x38] sm:$0xff] %vm711, %v668
    %720 = vst.msk [vmem:[#allocation5 + $0x40] sm:$0xff] %vm711, %v673
    %721 = vst.msk [vmem:[#allocation5 + $0x48] sm:$0xff] %vm711, %v678
    %722 = vst.msk [vmem:[#allocation5 + $0x50] sm:$0xff] %vm711, %v683
    %723 = vst.msk [vmem:[#allocation5 + $0x58] sm:$0xff] %vm711, %v688
    %724 = vst.msk [vmem:[#allocation5 + $0x60] sm:$0xff] %vm711, %v693
    %725 = vst.msk [vmem:[#allocation5 + $0x68] sm:$0xff] %vm711, %v698
    %726 = vst.msk [vmem:[#allocation5 + $0x70] sm:$0xff] %vm711, %v703
    %727 = vst.msk [vmem:[#allocation5 + $0x78] sm:$0xff] %vm711, %v708
    // Predicated region
    $region34: #{bcnet_forward.1} parent=1 // pred_check
      _
    $region35: #{bcnet_forward.1} parent=1 // pred_check_branch
      %729 = sbr.rel (0) target = $region37
    $region36: #{bcnet_forward.1} parent=1 // pred_region
      %s731 = ssub.s32 2048, 128
      %732 = vsyncadd [#allocation4], %s731
      %s733 = sshll.u32 [#allocation5], 4
      %s734 = int_to_ptr.vmem [resolvable:$true] %s733
      %739 = dma.vmem_to_hbm [thread:$0]  %s734, 128, %s7, [#allocation4], 128, 128, 8
    $region37: #{bcnet_forward.1} parent=1 // pred_fallthru
      _
    // Predicated region
    $region38: #{bcnet_forward.1} parent=1 // pred_check
      _
    $region39: #{bcnet_forward.1} parent=1 // pred_check_branch
      %741 = sbr.rel (0) target = $region41
    $region40: #{bcnet_forward.1} parent=1 // pred_region
      %742 = dma.done [#allocation4], 2048
    $region41: #{bcnet_forward.1} parent=1 // pred_fallthru
      _
    %743 = vsyncpa [#allocation3], 1
    %744 = vsyncpa [#allocation4], 1

</llo_original>
